<compile_context>
chip_gen: v6e
topology: v6e:2x2x1
jax: 0.10.0
libtpu: 0.0.40
codegen_flags: <defaults>
</compile_context>

<pallas_src>
import functools

import jax
import jax.numpy as jnp
import numpy as np
from jax import lax
from jax.experimental import pallas as pl
from jax.experimental.pallas import tpu as pltpu

_EPS = 1e-5


def _fwd_stats_kernel(up_ref, xg_ref, wtr_ref, wx_ref, bias_ref,
                      act_ref, sum_ref, ssq_ref):
    """conv branches + bias + ReLU for one row tile; accumulate BN sums (f32)."""
    tr = jnp.dot(up_ref[...], wtr_ref[...], preferred_element_type=jnp.float32)
    xo = jnp.dot(xg_ref[...], wx_ref[...], preferred_element_type=jnp.float32)
    act = jnp.maximum(tr + xo + bias_ref[...], 0.0)      # f32 epilogue
    act_ref[...] = act                                   # single lane-dense store

    @pl.when(pl.program_id(0) == 0)
    def _init():
        sum_ref[...] = jnp.zeros_like(sum_ref)
        ssq_ref[...] = jnp.zeros_like(ssq_ref)

    sum_ref[...] += jnp.sum(act, axis=0, keepdims=True)
    ssq_ref[...] += jnp.sum(act * act, axis=0, keepdims=True)


def _bn_apply_kernel(act_ref, scale_ref, shift_ref, out_ref):
    out_ref[...] = act_ref[...] * scale_ref[...] + shift_ref[...]


def _pick_tile(rows, target):
    """Largest multiple-of-8 divisor of `rows` that is <= target (or rows itself)."""
    if rows <= target:
        return rows
    t = (target // 8) * 8
    while t >= 8:
        if rows % t == 0:
            return t
        t -= 8
    return rows  # TODO(synk): pad + in-kernel row masking for awkward row counts.


@functools.partial(jax.jit, static_argnames=("tile_rows", "compute_dtype"))
def unet_block_forward(up_p, x_p, params, *, tile_rows=512,
                       compute_dtype=jnp.bfloat16):
    """up_p: (N, up_in, H, W), x_p: (N, x_in, 2H, 2W) -> (N, n_out, 2H, 2W)."""
    w_tr, b_tr, w_x, b_x, gamma, beta = (
        params["w_tr"], params["b_tr"], params["w_x"], params["b_x"],
        params["gamma"], params["beta"])

    N, up_in, H, W = up_p.shape
    Nx, x_in, H2, W2 = x_p.shape
    assert Nx == N and H2 == 2 * H and W2 == 2 * W
    up_out = w_tr.shape[1]
    x_out = w_x.shape[0]
    n_out = up_out + x_out
    C4 = 4 * n_out
    R1 = N * H * W            # grouped rows (one per low-res pixel)
    R2 = 4 * R1               # output pixels per channel (BatchNorm count)

    f32 = jnp.float32
    cdt = compute_dtype

    # ---- inputs: channel-last, sub-pixel grouped ----------------------------
    up_flat = jnp.transpose(up_p, (0, 2, 3, 1)).reshape(R1, up_in).astype(cdt)
    xg = (x_p.reshape(N, x_in, H, 2, W, 2)
              .transpose(0, 2, 4, 3, 5, 1)            # (N, H, W, a, b, c)
              .reshape(R1, 4 * x_in).astype(cdt))

    # ---- fold all weights into two lane-dense matrices ----------------------
    # ConvTranspose2d weight (up_in, up_out, 2, 2): column index = ab*n_out + d, d < up_out
    wtr_pad = jnp.zeros((up_in, 4, n_out), f32)
    wtr_pad = wtr_pad.at[:, :, :up_out].set(
        jnp.transpose(w_tr, (0, 2, 3, 1)).reshape(up_in, 4, up_out))
    wtr_pad = wtr_pad.reshape(up_in, C4).astype(cdt)
    # 1x1 conv weight, block-diagonal over the 4 sub-pixels: column = ab*n_out + up_out + d
    wx_mat = w_x.reshape(x_out, x_in).T                       # (x_in, x_out)
    wx_blk = jnp.kron(jnp.eye(4, dtype=f32), wx_mat)          # (4*x_in, 4*x_out)
    wx_pad = jnp.zeros((4 * x_in, 4, n_out), f32)
    wx_pad = wx_pad.at[:, :, up_out:].set(wx_blk.reshape(4 * x_in, 4, x_out))
    wx_pad = wx_pad.reshape(4 * x_in, C4).astype(cdt)

    # One merged bias ref: bias_cols[ab*n_out + ch] = [b_tr | b_x][ch]
    bias_cols = jnp.tile(jnp.concatenate([b_tr, b_x]).reshape(1, n_out),
                         (1, 4)).astype(f32)

    tile = _pick_tile(R1, tile_rows)
    grid = (R1 // tile,)
    cparams1 = pltpu.CompilerParams(dimension_semantics=("arbitrary",),
                                    vmem_limit_bytes=32 * 1024 * 1024)
    cparams2 = pltpu.CompilerParams(dimension_semantics=("parallel",),
                                    vmem_limit_bytes=32 * 1024 * 1024)

    row_spec = lambda cols: pl.BlockSpec((tile, cols), lambda i: (i, 0))
    full_spec = lambda arr: pl.BlockSpec(arr.shape, lambda i: (0, 0))

    # -------- pass 1: conv + ReLU activations + BN stats ----------------------
    act, colsum, colssq = pl.pallas_call(
        _fwd_stats_kernel,
        grid=grid,
        in_specs=[row_spec(up_in), row_spec(4 * x_in),
                  full_spec(wtr_pad), full_spec(wx_pad), full_spec(bias_cols)],
        out_specs=(pl.BlockSpec((tile, C4), lambda i: (i, 0)),
                   pl.BlockSpec((1, C4), lambda i: (0, 0)),     # resident accumulators
                   pl.BlockSpec((1, C4), lambda i: (0, 0))),
        out_shape=(jax.ShapeDtypeStruct((R1, C4), f32),
                   jax.ShapeDtypeStruct((1, C4), f32),
                   jax.ShapeDtypeStruct((1, C4), f32)),
        compiler_params=cparams1,
    )(up_flat, xg, wtr_pad, wx_pad, bias_cols)

    # -------- tiny per-channel BatchNorm math (training-mode batch stats) -----
    count = jnp.float32(R2)
    ch_sum = colsum.reshape(4, n_out).sum(axis=0)     # fold the 4 sub-pixel groups
    ch_ssq = colssq.reshape(4, n_out).sum(axis=0)
    mean = ch_sum / count
    var = jnp.maximum(ch_ssq / count - mean * mean, 0.0)   # biased variance, clamped
    inv = lax.rsqrt(var + _EPS)
    scale = gamma * inv
    shift = beta - mean * scale
    scale_cols = jnp.tile(scale.reshape(1, n_out), (1, 4)).astype(f32)
    shift_cols = jnp.tile(shift.reshape(1, n_out), (1, 4)).astype(f32)

    # -------- pass 2: normalize in place ---------------------------------------
    out_flat = pl.pallas_call(
        _bn_apply_kernel,
        grid=grid,
        in_specs=[pl.BlockSpec((tile, C4), lambda i: (i, 0)),
                  full_spec(scale_cols), full_spec(shift_cols)],
        out_specs=pl.BlockSpec((tile, C4), lambda i: (i, 0)),
        out_shape=jax.ShapeDtypeStruct((R1, C4), f32),
        input_output_aliases={0: 0},
        compiler_params=cparams2,
    )(act, scale_cols, shift_cols)

    # -------- single un-scatter transpose back to NCHW -------------------------
    out = (out_flat.reshape(N, H, W, 2, 2, n_out)
                   .transpose(0, 5, 1, 3, 2, 4)        # (N, ch, H, a, W, b)
                   .reshape(N, n_out, 2 * H, 2 * W))
    return out


def reference_forward(up_p, x_p, params):
    """Plain-JAX reference (training-mode BatchNorm) for a numerical check."""
    w_tr, b_tr, w_x, b_x, gamma, beta = (
        params["w_tr"], params["b_tr"], params["w_x"], params["b_x"],
        params["gamma"], params["beta"])
    N, up_in, H, W = up_p.shape
    up_out = w_tr.shape[1]
    x_out = w_x.shape[0]

    # ConvTranspose2d(k=2, s=2): out[:, d, 2h+a, 2w+b] = sum_c in[:,c,h,w] W[c,d,a,b] + bias
    tr = jnp.einsum('nchw,cdab->ndhawb', up_p, w_tr).reshape(N, up_out, 2 * H, 2 * W)
    tr = tr + b_tr[None, :, None, None]
    xo = jnp.einsum('nchw,dc->ndhw', x_p, w_x.reshape(x_out, -1)) + b_x[None, :, None, None]
    cat = jnp.concatenate([tr, xo], axis=1)
    r = jnp.maximum(cat, 0.0)
    mean = r.mean(axis=(0, 2, 3), keepdims=True)
    var = ((r - mean) ** 2).mean(axis=(0, 2, 3), keepdims=True)
    return ((r - mean) * lax.rsqrt(var + 1e-5) * gamma[None, :, None, None]
            + beta[None, :, None, None])


if __name__ == "__main__":
    # Small shapes: up_in=x_in=8, n_out=8 (up_out=x_out=4), N=2.
    # Non-square spatial (16x8 -> 32x16) exercises the sub-pixel scatter mapping.
    N, up_in, x_in, n_out = 2, 8, 8, 8
    up_out = x_out = n_out // 2
    H, W = 16, 8

    key = jax.random.PRNGKey(0)
    k = jax.random.split(key, 8)
    up_p = jax.random.normal(k[0], (N, up_in, H, W), jnp.float32)
    x_p = jax.random.normal(k[1], (N, x_in, 2 * H, 2 * W), jnp.float32)

    params = {
        "w_tr": 0.1 * jax.random.normal(k[2], (up_in, up_out, 2, 2), jnp.float32),
        "b_tr": 0.1 * jax.random.normal(k[3], (up_out,), jnp.float32),
        "w_x": 0.1 * jax.random.normal(k[4], (x_out, x_in, 1, 1), jnp.float32),
        "b_x": 0.1 * jax.random.normal(k[5], (x_out,), jnp.float32),
        "gamma": 1.0 + 0.1 * jax.random.normal(k[6], (n_out,), jnp.float32),
        "beta": 0.1 * jax.random.normal(k[7], (n_out,), jnp.float32),
    }

    ref = jax.block_until_ready(reference_forward(up_p, x_p, params))

    # f32 matmul path, tile_rows=64 -> grid of 4 steps (exercises the stat accumulator).
    out_f32 = jax.block_until_ready(
        unet_block_forward(up_p, x_p, params, tile_rows=64,
                           compute_dtype=jnp.float32))
    assert out_f32.shape == (N, n_out, 2 * H, 2 * W), out_f32.shape
    np.testing.assert_allclose(np.asarray(out_f32), np.asarray(ref),
                               rtol=2e-3, atol=2e-3)

    # bf16 matmul operands (production path on v6e/v7x), f32 epilogue -> looser tolerance.
    out_bf16 = jax.block_until_ready(
        unet_block_forward(up_p, x_p, params, tile_rows=64,
                           compute_dtype=jnp.bfloat16))
    np.testing.assert_allclose(np.asarray(out_bf16), np.asarray(ref),
                               rtol=5e-2, atol=5e-2)

    print("KERNEL_OK")
</pallas_src>

<mosaic_0001>
module attributes {stable_mosaic.version = 11 : i64} {
  func.func @_fwd_stats_kernel(%arg0: i32, %arg1: memref<64x8xf32, #tpu.memory_space<vmem>>, %arg2: memref<64x32xf32, #tpu.memory_space<vmem>>, %arg3: memref<8x32xf32, #tpu.memory_space<vmem>>, %arg4: memref<32x32xf32, #tpu.memory_space<vmem>>, %arg5: memref<1x32xf32, #tpu.memory_space<vmem>>, %arg6: memref<64x32xf32, #tpu.memory_space<vmem>>, %arg7: memref<1x32xf32, #tpu.memory_space<vmem>>, %arg8: memref<1x32xf32, #tpu.memory_space<vmem>>) attributes {dimension_semantics = [#tpu.dimension_semantics<arbitrary>], iteration_bounds = array<i64: 4>, scalar_prefetch = 0 : i64, scratch_operands = 0 : i64, tpu.core_type = #tpu.core_type<tc>, window_params = [{transform_indices = @transform_0, window_bounds = array<i64: 64, 8>}, {transform_indices = @transform_1, window_bounds = array<i64: 64, 32>}, {pipeline_mode = #tpu.pipeline_mode<synchronous>, transform_indices = @transform_2, window_bounds = array<i64: 8, 32>}, {pipeline_mode = #tpu.pipeline_mode<synchronous>, transform_indices = @transform_3, window_bounds = array<i64: 32, 32>}, {pipeline_mode = #tpu.pipeline_mode<synchronous>, transform_indices = @transform_4, window_bounds = array<i64: 1, 32>}, {transform_indices = @transform_5, window_bounds = array<i64: 64, 32>}, {pipeline_mode = #tpu.pipeline_mode<synchronous>, transform_indices = @transform_6, window_bounds = array<i64: 1, 32>}, {pipeline_mode = #tpu.pipeline_mode<synchronous>, transform_indices = @transform_7, window_bounds = array<i64: 1, 32>}]} {
    %c0 = arith.constant 0 : index
    %c0_0 = arith.constant 0 : index
    %0 = vector.load %arg1[%c0, %c0_0] : memref<64x8xf32, #tpu.memory_space<vmem>>, vector<64x8xf32>
    %c0_1 = arith.constant 0 : index
    %c0_2 = arith.constant 0 : index
    %1 = vector.load %arg3[%c0_1, %c0_2] : memref<8x32xf32, #tpu.memory_space<vmem>>, vector<8x32xf32>
    %cst = arith.constant dense<0.000000e+00> : vector<64x32xf32>
    %2 = tpu.matmul %0, %1, %cst {dimension_numbers = #tpu.dot_dimension_numbers<[1], [0], [0], [1], [0, 0, 1, 1], [], []>} : vector<64x8xf32>, vector<8x32xf32>, vector<64x32xf32> -> vector<64x32xf32>
    %c0_3 = arith.constant 0 : index
    %c0_4 = arith.constant 0 : index
    %3 = vector.load %arg2[%c0_3, %c0_4] : memref<64x32xf32, #tpu.memory_space<vmem>>, vector<64x32xf32>
    %c0_5 = arith.constant 0 : index
    %c0_6 = arith.constant 0 : index
    %4 = vector.load %arg4[%c0_5, %c0_6] : memref<32x32xf32, #tpu.memory_space<vmem>>, vector<32x32xf32>
    %cst_7 = arith.constant dense<0.000000e+00> : vector<64x32xf32>
    %5 = tpu.matmul %3, %4, %cst_7 {dimension_numbers = #tpu.dot_dimension_numbers<[1], [0], [0], [1], [0, 0, 1, 1], [], []>} : vector<64x32xf32>, vector<32x32xf32>, vector<64x32xf32> -> vector<64x32xf32>
    %6 = arith.addf %2, %5 : vector<64x32xf32>
    %c0_8 = arith.constant 0 : index
    %c0_9 = arith.constant 0 : index
    %7 = vector.load %arg5[%c0_8, %c0_9] : memref<1x32xf32, #tpu.memory_space<vmem>>, vector<1x32xf32>
    %8 = vector.broadcast %7 : vector<1x32xf32> to vector<64x32xf32>
    %9 = arith.addf %6, %8 : vector<64x32xf32>
    %cst_10 = arith.constant 0.000000e+00 : f32
    %10 = vector.broadcast %cst_10 : f32 to vector<64x32xf32>
    %11 = arith.maximumf %9, %10 : vector<64x32xf32>
    %c0_11 = arith.constant 0 : index
    %c0_12 = arith.constant 0 : index
    %12 = vector.load %arg6[%c0_11, %c0_12] : memref<64x32xf32, #tpu.memory_space<vmem>>, vector<64x32xf32>
    tpu.vector_store %arg6[%c0_11, %c0_12], %11 {strides = array<i32>} : memref<64x32xf32, #tpu.memory_space<vmem>>, vector<64x32xf32>,
    %c0_i32 = arith.constant 0 : i32
    %13 = arith.cmpi eq, %arg0, %c0_i32 : i32
    %14 = arith.extui %13 : i1 to i32
    %c0_i32_13 = arith.constant 0 : i32
    %15 = arith.cmpi ne, %14, %c0_i32_13 : i32
    scf.if %15 {
      %cst_24 = arith.constant 0.000000e+00 : f32
      %27 = vector.broadcast %cst_24 : f32 to vector<1x32xf32>
      %c0_25 = arith.constant 0 : index
      %c0_26 = arith.constant 0 : index
      %28 = vector.load %arg7[%c0_25, %c0_26] : memref<1x32xf32, #tpu.memory_space<vmem>>, vector<1x32xf32>
      tpu.vector_store %arg7[%c0_25, %c0_26], %27 {strides = array<i32>} : memref<1x32xf32, #tpu.memory_space<vmem>>, vector<1x32xf32>,
      %cst_27 = arith.constant 0.000000e+00 : f32
      %29 = vector.broadcast %cst_27 : f32 to vector<1x32xf32>
      %c0_28 = arith.constant 0 : index
      %c0_29 = arith.constant 0 : index
      %30 = vector.load %arg8[%c0_28, %c0_29] : memref<1x32xf32, #tpu.memory_space<vmem>>, vector<1x32xf32>
      tpu.vector_store %arg8[%c0_28, %c0_29], %29 {strides = array<i32>} : memref<1x32xf32, #tpu.memory_space<vmem>>, vector<1x32xf32>,
    } else {
    }
    %c0_14 = arith.constant 0 : index
    %c0_15 = arith.constant 0 : index
    %16 = vector.load %arg7[%c0_14, %c0_15] : memref<1x32xf32, #tpu.memory_space<vmem>>, vector<1x32xf32>
    %cst_16 = arith.constant dense<0.000000e+00> : vector<32xf32>
    %17 = vector.multi_reduction <add>, %11, %cst_16 [0] : vector<64x32xf32> to vector<32xf32>
    %18 = vector.shape_cast %17 : vector<32xf32> to vector<1x32xf32>
    %19 = arith.addf %16, %18 : vector<1x32xf32>
    %c0_17 = arith.constant 0 : index
    %c0_18 = arith.constant 0 : index
    %20 = vector.load %arg7[%c0_17, %c0_18] : memref<1x32xf32, #tpu.memory_space<vmem>>, vector<1x32xf32>
    tpu.vector_store %arg7[%c0_17, %c0_18], %19 {strides = array<i32>} : memref<1x32xf32, #tpu.memory_space<vmem>>, vector<1x32xf32>,
    %c0_19 = arith.constant 0 : index
    %c0_20 = arith.constant 0 : index
    %21 = vector.load %arg8[%c0_19, %c0_20] : memref<1x32xf32, #tpu.memory_space<vmem>>, vector<1x32xf32>
    %22 = arith.mulf %11, %11 : vector<64x32xf32>
    %cst_21 = arith.constant dense<0.000000e+00> : vector<32xf32>
    %23 = vector.multi_reduction <add>, %22, %cst_21 [0] : vector<64x32xf32> to vector<32xf32>
    %24 = vector.shape_cast %23 : vector<32xf32> to vector<1x32xf32>
    %25 = arith.addf %21, %24 : vector<1x32xf32>
    %c0_22 = arith.constant 0 : index
    %c0_23 = arith.constant 0 : index
    %26 = vector.load %arg8[%c0_22, %c0_23] : memref<1x32xf32, #tpu.memory_space<vmem>>, vector<1x32xf32>
    tpu.vector_store %arg8[%c0_22, %c0_23], %25 {strides = array<i32>} : memref<1x32xf32, #tpu.memory_space<vmem>>, vector<1x32xf32>,
    return
  }
  func.func @transform_0(%arg0: i32) -> (i32, i32) {
    %c0_i32 = arith.constant 0 : i32
    %c0_i32_0 = arith.constant 0 : i32
    return %arg0, %c0_i32 : i32, i32
  }
  func.func @transform_1(%arg0: i32) -> (i32, i32) {
    %c0_i32 = arith.constant 0 : i32
    %c0_i32_0 = arith.constant 0 : i32
    return %arg0, %c0_i32 : i32, i32
  }
  func.func @transform_2(%arg0: i32) -> (i32, i32) {
    %c0_i32 = arith.constant 0 : i32
    %c0_i32_0 = arith.constant 0 : i32
    %c0_i32_1 = arith.constant 0 : i32
    return %c0_i32, %c0_i32_0 : i32, i32
  }
  func.func @transform_3(%arg0: i32) -> (i32, i32) {
    %c0_i32 = arith.constant 0 : i32
    %c0_i32_0 = arith.constant 0 : i32
    %c0_i32_1 = arith.constant 0 : i32
    return %c0_i32, %c0_i32_0 : i32, i32
  }
  func.func @transform_4(%arg0: i32) -> (i32, i32) {
    %c0_i32 = arith.constant 0 : i32
    %c0_i32_0 = arith.constant 0 : i32
    %c0_i32_1 = arith.constant 0 : i32
    return %c0_i32, %c0_i32_0 : i32, i32
  }
  func.func @transform_5(%arg0: i32) -> (i32, i32) {
    %c0_i32 = arith.constant 0 : i32
    %c0_i32_0 = arith.constant 0 : i32
    return %arg0, %c0_i32 : i32, i32
  }
  func.func @transform_6(%arg0: i32) -> (i32, i32) {
    %c0_i32 = arith.constant 0 : i32
    %c0_i32_0 = arith.constant 0 : i32
    %c0_i32_1 = arith.constant 0 : i32
    return %c0_i32, %c0_i32_0 : i32, i32
  }
  func.func @transform_7(%arg0: i32) -> (i32, i32) {
    %c0_i32 = arith.constant 0 : i32
    %c0_i32_0 = arith.constant 0 : i32
    %c0_i32_1 = arith.constant 0 : i32
    return %c0_i32, %c0_i32_0 : i32, i32
  }
}

module attributes {stable_mosaic.version = 11 : i64} {
  func.func @_bn_apply_kernel(%arg0: i32, %arg1: memref<64x32xf32, #tpu.memory_space<vmem>>, %arg2: memref<1x32xf32, #tpu.memory_space<vmem>>, %arg3: memref<1x32xf32, #tpu.memory_space<vmem>>, %arg4: memref<64x32xf32, #tpu.memory_space<vmem>>) attributes {dimension_semantics = [#tpu.dimension_semantics<parallel>], iteration_bounds = array<i64: 4>, scalar_prefetch = 0 : i64, scratch_operands = 0 : i64, tpu.core_type = #tpu.core_type<tc>, window_params = [{transform_indices = @transform_0, window_bounds = array<i64: 64, 32>}, {pipeline_mode = #tpu.pipeline_mode<synchronous>, transform_indices = @transform_1, window_bounds = array<i64: 1, 32>}, {pipeline_mode = #tpu.pipeline_mode<synchronous>, transform_indices = @transform_2, window_bounds = array<i64: 1, 32>}, {transform_indices = @transform_3, window_bounds = array<i64: 64, 32>}]} {
    %c0 = arith.constant 0 : index
    %c0_0 = arith.constant 0 : index
    %0 = vector.load %arg1[%c0, %c0_0] : memref<64x32xf32, #tpu.memory_space<vmem>>, vector<64x32xf32>
    %c0_1 = arith.constant 0 : index
    %c0_2 = arith.constant 0 : index
    %1 = vector.load %arg2[%c0_1, %c0_2] : memref<1x32xf32, #tpu.memory_space<vmem>>, vector<1x32xf32>
    %2 = vector.broadcast %1 : vector<1x32xf32> to vector<64x32xf32>
    %3 = arith.mulf %0, %2 : vector<64x32xf32>
    %c0_3 = arith.constant 0 : index
    %c0_4 = arith.constant 0 : index
    %4 = vector.load %arg3[%c0_3, %c0_4] : memref<1x32xf32, #tpu.memory_space<vmem>>, vector<1x32xf32>
    %5 = vector.broadcast %4 : vector<1x32xf32> to vector<64x32xf32>
    %6 = arith.addf %3, %5 : vector<64x32xf32>
    %c0_5 = arith.constant 0 : index
    %c0_6 = arith.constant 0 : index
    %7 = vector.load %arg4[%c0_5, %c0_6] : memref<64x32xf32, #tpu.memory_space<vmem>>, vector<64x32xf32>
    tpu.vector_store %arg4[%c0_5, %c0_6], %6 {strides = array<i32>} : memref<64x32xf32, #tpu.memory_space<vmem>>, vector<64x32xf32>,
    return
  }
  func.func @transform_0(%arg0: i32) -> (i32, i32) {
    %c0_i32 = arith.constant 0 : i32
    %c0_i32_0 = arith.constant 0 : i32
    return %arg0, %c0_i32 : i32, i32
  }
  func.func @transform_1(%arg0: i32) -> (i32, i32) {
    %c0_i32 = arith.constant 0 : i32
    %c0_i32_0 = arith.constant 0 : i32
    %c0_i32_1 = arith.constant 0 : i32
    return %c0_i32, %c0_i32_0 : i32, i32
  }
  func.func @transform_2(%arg0: i32) -> (i32, i32) {
    %c0_i32 = arith.constant 0 : i32
    %c0_i32_0 = arith.constant 0 : i32
    %c0_i32_1 = arith.constant 0 : i32
    return %c0_i32, %c0_i32_0 : i32, i32
  }
  func.func @transform_3(%arg0: i32) -> (i32, i32) {
    %c0_i32 = arith.constant 0 : i32
    %c0_i32_0 = arith.constant 0 : i32
    return %arg0, %c0_i32 : i32, i32
  }
}

</mosaic_0001>

<llo_original>
// kernel: unet_block_forward.3
$region0: #{unet_block_forward.3}
  #allocation0 [shape = 'u32[]', space=smem, size = 0x4, offset = 0x4, fixed_abs, tag = 'smem constant byte address 0x4 - core index']
  #allocation1 [shape = 'u32[144,128]{1,0:T(1,128)}', space=vmem, size = 0x12000, scoped, tag = 'internal scratch']
  %s0 = inlined_call_operand.vmem [shape: f32[256,32], index: 0, kind: input, shape index: {}, may-alias: {0,3}]
  %s1 = inlined_call_operand.vmem [shape: f32[1,32], index: 1, kind: input, shape index: {}]
  %s2 = inlined_call_operand.vmem [shape: f32[1,32], index: 2, kind: input, shape index: {}]
  %s3 = inlined_call_operand.vmem [shape: f32[256,32], index: 3, kind: output, shape index: {}, may-alias: {0,3}]
  %s4 = sld [smem:[#allocation0]]
  $region45: #{unet_block_forward.3} parent=0
    _
  %s6 = ssub.s32 1, %s4
  %s7 = scalar_select 0, %s6, %s4
  loop: start=0, step=1, limit=6
  $region2: #{unet_block_forward.3} parent=0 // loop_pre_header
    _
  $region3: #{unet_block_forward.3} parent=0 // loop_header
    %s9 = sphi 0, %s13
    %p10 = scmp.ge.s32.totalorder %s9, 6
    %s19 = sphi 0, %s21
    %s22 = sphi 0, %s19
    %s23 = sphi 0, %s22
    %s39 = sphi 0, %s23
    %s43 = sphi 0, %s43
    %s45 = sphi 0, %s43
    %s46 = sphi 0, %s45
    %s60 = sphi 0, %s46
    %s64 = sphi 0, %s64
    %s66 = sphi 0, %s64
    %s67 = sphi 0, %s66
    %s81 = sphi 0, %s67
    %s87 = sphi 0, %s89
    %s90 = sphi 0, %s87
    %s91 = sphi 0, %s90
    %s107 = sphi 0, %s91
  $region4: #{unet_block_forward.3} parent=0 // loop_header_branch
    %12 = sbr.rel (%p10) target = $region8
  $region5: #{unet_block_forward.3} parent=0 // loop_body
    %s14 = ssub.s32 %s9, 1
    %s15 = ssub.s32 %s9, 2
    %s16 = sadd.s32 %s9, 1
    %s17 = ssub.s32 %s9, %s16
    %p18 = scmp.eq.s32.totalorder %s17, 0
    %s20 = sadd.s32 %s19, 1
    %s21 = scalar_select %p18, %s19, %s20
    %p24 = pneg %p18
    %p25 = scmp.eq.s32.totalorder %s9, 3
    %p26 = por %p24, %p25
    %p27 = scmp.ne.s32.totalorder %s19, %s22
    %p28 = scmp.eq.s32.totalorder %s9, 0
    %p29 = por %p27, %p28
    %p30 = scmp.ne.s32.totalorder %s19, %s22
    %p31 = scmp.eq.s32.totalorder %s14, 3
    %p32 = por %p30, %p31
    %p33 = scmp.ne.s32.totalorder %s22, %s23
    %p34 = scmp.eq.s32.totalorder %s14, 0
    %p35 = por %p33, %p34
    %p36 = scmp.ne.s32.totalorder %s22, %s23
    %p37 = scmp.eq.s32.totalorder %s15, 3
    %p38 = por %p36, %p37
    %p40 = scmp.ne.s32.totalorder %s23, %s39
    %p41 = scmp.eq.s32.totalorder %s15, 0
    %p42 = por %p40, %p41
    %s44 = sadd.s32 %s43, 1
    %p47 = scmp.eq.s32.totalorder %s9, 3
    %p48 = scmp.ne.s32.totalorder %s43, %s45
    %p49 = scmp.eq.s32.totalorder %s9, 0
    %p50 = por %p48, %p49
    %p51 = scmp.ne.s32.totalorder %s43, %s45
    %p52 = scmp.eq.s32.totalorder %s14, 3
    %p53 = por %p51, %p52
    %p54 = scmp.ne.s32.totalorder %s45, %s46
    %p55 = scmp.eq.s32.totalorder %s14, 0
    %p56 = por %p54, %p55
    %p57 = scmp.ne.s32.totalorder %s45, %s46
    %p58 = scmp.eq.s32.totalorder %s15, 3
    %p59 = por %p57, %p58
    %p61 = scmp.ne.s32.totalorder %s46, %s60
    %p62 = scmp.eq.s32.totalorder %s15, 0
    %p63 = por %p61, %p62
    %s65 = sadd.s32 %s64, 1
    %p68 = scmp.eq.s32.totalorder %s9, 3
    %p69 = scmp.ne.s32.totalorder %s64, %s66
    %p70 = scmp.eq.s32.totalorder %s9, 0
    %p71 = por %p69, %p70
    %p72 = scmp.ne.s32.totalorder %s64, %s66
    %p73 = scmp.eq.s32.totalorder %s14, 3
    %p74 = por %p72, %p73
    %p75 = scmp.ne.s32.totalorder %s66, %s67
    %p76 = scmp.eq.s32.totalorder %s14, 0
    %p77 = por %p75, %p76
    %p78 = scmp.ne.s32.totalorder %s66, %s67
    %p79 = scmp.eq.s32.totalorder %s15, 3
    %p80 = por %p78, %p79
    %p82 = scmp.ne.s32.totalorder %s67, %s81
    %p83 = scmp.eq.s32.totalorder %s15, 0
    %p84 = por %p82, %p83
    %s85 = ssub.s32 %s9, %s16
    %p86 = scmp.eq.s32.totalorder %s85, 0
    %s88 = sadd.s32 %s87, 1
    %s89 = scalar_select %p86, %s87, %s88
    %p92 = pneg %p86
    %p93 = scmp.eq.s32.totalorder %s9, 3
    %p94 = por %p92, %p93
    %p95 = scmp.ne.s32.totalorder %s87, %s90
    %p96 = scmp.eq.s32.totalorder %s9, 0
    %p97 = por %p95, %p96
    %p98 = scmp.ne.s32.totalorder %s87, %s90
    %p99 = scmp.eq.s32.totalorder %s14, 3
    %p100 = por %p98, %p99
    %p101 = scmp.ne.s32.totalorder %s90, %s91
    %p102 = scmp.eq.s32.totalorder %s14, 0
    %p103 = por %p101, %p102
    %p104 = scmp.ne.s32.totalorder %s90, %s91
    %p105 = scmp.eq.s32.totalorder %s15, 3
    %p106 = por %p104, %p105
    %p108 = scmp.ne.s32.totalorder %s91, %s107
    %p109 = scmp.eq.s32.totalorder %s15, 0
    %p110 = por %p108, %p109
    %p111 = scmp.le.s32.totalorder 1, %s9
    %p112 = scmp.lt.s32.totalorder %s9, 5
    %p113 = pnand %p111, %p112
    %p114 = pneg %p113
    // Predicated region
    $region9: #{unet_block_forward.3} parent=5 // pred_check
      _
    $region10: #{unet_block_forward.3} parent=5 // pred_check_branch
      %116 = sbr.rel (%p113) target = $region12
    $region11: #{unet_block_forward.3} parent=5 // pred_region
      %s117 = ssub.s32 %s9, 1
      // Predicated region
      $region13: #{unet_block_forward.3} parent=11 // pred_check
        %p118 = pneg %p56
      $region14: #{unet_block_forward.3} parent=11 // pred_check_branch
        %120 = sbr.rel (%p118) target = $region16
      $region15: #{unet_block_forward.3} parent=11 // pred_region
        _
      $region16: #{unet_block_forward.3} parent=11 // pred_fallthru
        _
      // Predicated region
      $region17: #{unet_block_forward.3} parent=11 // pred_check
        %p121 = pneg %p77
      $region18: #{unet_block_forward.3} parent=11 // pred_check_branch
        %123 = sbr.rel (%p121) target = $region20
      $region19: #{unet_block_forward.3} parent=11 // pred_region
        _
      $region20: #{unet_block_forward.3} parent=11 // pred_fallthru
        _
    $region12: #{unet_block_forward.3} parent=5 // pred_fallthru
      _
    %p124 = scmp.lt.s32.totalorder %s9, 4
    // Predicated region
    $region21: #{unet_block_forward.3} parent=5 // pred_check
      %p125 = pneg %p124
    $region22: #{unet_block_forward.3} parent=5 // pred_check_branch
      %127 = sbr.rel (%p125) target = $region24
    $region23: #{unet_block_forward.3} parent=5 // pred_region
      // Predicated region
      $region25: #{unet_block_forward.3} parent=23 // pred_check
        %p128 = pneg %p29
      $region26: #{unet_block_forward.3} parent=23 // pred_check_branch
        %130 = sbr.rel (%p128) target = $region28
      $region27: #{unet_block_forward.3} parent=23 // pred_region
        %s131 = smul.u32 8, %s9
        %p132 = scmp.lt.s32.totalorder %s131, 31
        %s133 = scalar_select %p132, %s131, 31
        %s134 = smul.addr %s133, 8
        %s135 = scalar_lea.vmem %s0, %s134
        %s136 = smul.u32 8, %s9
      $region28: #{unet_block_forward.3} parent=23 // pred_fallthru
        _
    $region24: #{unet_block_forward.3} parent=5 // pred_fallthru
      _
    %p137 = scmp.le.s32.totalorder 1, %s9
    %p138 = scmp.lt.s32.totalorder %s9, 5
    %p139 = pnand %p137, %p138
    %p140 = pneg %p139
    // Predicated region
    $region29: #{unet_block_forward.3} parent=5 // pred_check
      _
    $region30: #{unet_block_forward.3} parent=5 // pred_check_branch
      %142 = sbr.rel (%p139) target = $region32
    $region31: #{unet_block_forward.3} parent=5 // pred_region
      %s143 = ssub.s32 %s9, 1
      %s144 = smul.u32 8, %s14
      %p145 = scmp.lt.s32.totalorder %s144, 31
      %s146 = scalar_select %p145, %s144, 31
      %s147 = smul.addr %s146, 8
      %s148 = scalar_lea.vmem %s0, %s147
      %p149 = pneg %p35
      %p150 = pneg %p32
      %p151 = pneg %p56
      %p152 = pneg %p53
      %p153 = pneg %p77
      %p154 = pneg %p74
      %p155 = pneg %p103
      %p156 = pneg %p100
      %s157 = smul.u32 8, %s14
      %p158 = scmp.lt.s32.totalorder %s157, 31
      %s159 = scalar_select %p158, %s157, 31
      %s160 = smul.addr %s159, 8
      %s161 = scalar_lea.vmem %s3, %s160
      %s162 = smul.u32 8, %s14
      %p163 = scmp.lt.s32.totalorder %s162, 31
      %s164 = scalar_select %p163, %s162, 31
      %s165 = smul.addr %s164, 8
      %s166 = scalar_lea.vmem %s0, %s165
      %s167 = smul.u32 8, %s14
      %s168 = smul.u32 8, %s14
      %p169 = scmp.lt.s32.totalorder %s168, 31
      %s170 = scalar_select %p169, %s168, 31
      %s171 = smul.addr %s170, 8
      %s172 = scalar_lea.vmem %s3, %s171
      %s173 = smul.u32 8, %s14
      %v174 = vld [vmem:[%s166] sm:$0xff]
      %v175 = vld [vmem:[%s166 + $0x8] sm:$0xff]
      %v176 = vld [vmem:[%s166 + $0x10] sm:$0xff]
      %v177 = vld [vmem:[%s166 + $0x18] sm:$0xff]
      %v178 = vld [vmem:[%s166 + $0x20] sm:$0xff]
      %v179 = vld [vmem:[%s166 + $0x28] sm:$0xff]
      %v180 = vld [vmem:[%s166 + $0x30] sm:$0xff]
      %v181 = vld [vmem:[%s166 + $0x38] sm:$0xff]
      %v182 = vld [vmem:[%s1] sm:$0x1]
      %v184 = vlaneseq
      %v185 = vshrl.u32 %v184, 7
      %v186 = vsub.s32 0, %v185
      %v187 = vrot.slane %v182, %v186
      %v189 = vmul.f32 %v174, %v187
      %v190 = vmul.f32 %v175, %v187
      %v191 = vmul.f32 %v176, %v187
      %v192 = vmul.f32 %v177, %v187
      %v193 = vmul.f32 %v178, %v187
      %v194 = vmul.f32 %v179, %v187
      %v195 = vmul.f32 %v180, %v187
      %v196 = vmul.f32 %v181, %v187
      %v197 = vld [vmem:[%s2] sm:$0x1]
      %v199 = vlaneseq
      %v200 = vshrl.u32 %v199, 7
      %v201 = vsub.s32 0, %v200
      %v202 = vrot.slane %v197, %v201
      %v204 = vadd.f32 %v189, %v202
      %v205 = vadd.f32 %v190, %v202
      %v206 = vadd.f32 %v191, %v202
      %v207 = vadd.f32 %v192, %v202
      %v208 = vadd.f32 %v193, %v202
      %v209 = vadd.f32 %v194, %v202
      %v210 = vadd.f32 %v195, %v202
      %v211 = vadd.f32 %v196, %v202
      %vm212 = vcmask 261120
      %213 = vst.msk [vmem:[%s172] sm:$0xff] %vm212, %v204
      %214 = vst.msk [vmem:[%s172 + $0x8] sm:$0xff] %vm212, %v205
      %215 = vst.msk [vmem:[%s172 + $0x10] sm:$0xff] %vm212, %v206
      %216 = vst.msk [vmem:[%s172 + $0x18] sm:$0xff] %vm212, %v207
      %217 = vst.msk [vmem:[%s172 + $0x20] sm:$0xff] %vm212, %v208
      %218 = vst.msk [vmem:[%s172 + $0x28] sm:$0xff] %vm212, %v209
      %219 = vst.msk [vmem:[%s172 + $0x30] sm:$0xff] %vm212, %v210
      %220 = vst.msk [vmem:[%s172 + $0x38] sm:$0xff] %vm212, %v211
      %s221 = smul.u32 8, %s14
      %p222 = scmp.lt.s32.totalorder %s221, 31
      %s223 = scalar_select %p222, %s221, 31
      %s224 = smul.addr %s223, 8
      %s225 = scalar_lea.vmem %s3, %s224
      // Predicated region
      $region33: #{unet_block_forward.3} parent=31 // pred_check
        %p226 = pneg %p100
      $region34: #{unet_block_forward.3} parent=31 // pred_check_branch
        %228 = sbr.rel (%p226) target = $region36
      $region35: #{unet_block_forward.3} parent=31 // pred_region
        %s229 = smul.u32 8, %s14
      $region36: #{unet_block_forward.3} parent=31 // pred_fallthru
        _
    $region32: #{unet_block_forward.3} parent=5 // pred_fallthru
      _
    %p230 = scmp.le.s32.totalorder 2, %s9
    // Predicated region
    $region37: #{unet_block_forward.3} parent=5 // pred_check
      %p231 = pneg %p230
    $region38: #{unet_block_forward.3} parent=5 // pred_check_branch
      %233 = sbr.rel (%p231) target = $region40
    $region39: #{unet_block_forward.3} parent=5 // pred_region
      %s234 = ssub.s32 %s9, 2
      // Predicated region
      $region41: #{unet_block_forward.3} parent=39 // pred_check
        %p235 = pneg %p106
      $region42: #{unet_block_forward.3} parent=39 // pred_check_branch
        %237 = sbr.rel (%p235) target = $region44
      $region43: #{unet_block_forward.3} parent=39 // pred_region
        %s238 = smul.u32 8, %s15
        %p239 = scmp.lt.s32.totalorder %s238, 31
        %s240 = scalar_select %p239, %s238, 31
        %s241 = smul.addr %s240, 8
        %s242 = scalar_lea.vmem %s3, %s241
      $region44: #{unet_block_forward.3} parent=39 // pred_fallthru
        _
    $region40: #{unet_block_forward.3} parent=5 // pred_fallthru
      _
  $region6: #{unet_block_forward.3} parent=0 // loop_footer
    %s13 = sadd.s32 1, %s9
  $region7: #{unet_block_forward.3} parent=0 // loop_footer_branch
    %8 = sbr.rel target = $region3
  $region8: #{unet_block_forward.3} parent=0 // loop_exit
    _

// kernel: unet_block_forward.2
$region0: #{unet_block_forward.2}
  #allocation0 [shape = 'u32[]', space=smem, size = 0x4, offset = 0x4, fixed_abs, tag = 'smem constant byte address 0x4 - core index']
  #allocation1 [shape = 'u32[144,128]{1,0:T(1,128)}', space=vmem, size = 0x12000, scoped, tag = 'internal scratch']
  %s0 = inlined_call_operand.vmem [shape: f32[256,8], index: 0, kind: input, shape index: {}]
  %s1 = inlined_call_operand.vmem [shape: f32[256,32], index: 1, kind: input, shape index: {}]
  %s2 = inlined_call_operand.vmem [shape: f32[8,32], index: 2, kind: input, shape index: {}]
  %s3 = inlined_call_operand.vmem [shape: f32[32,32], index: 3, kind: input, shape index: {}]
  %s4 = inlined_call_operand.vmem [shape: f32[1,32], index: 4, kind: input, shape index: {}]
  %s5 = inlined_call_operand.vmem [shape: f32[256,32], index: 5, kind: output, shape index: {0}]
  %s6 = inlined_call_operand.vmem [shape: f32[1,32], index: 6, kind: output, shape index: {1}]
  %s7 = inlined_call_operand.vmem [shape: f32[1,32], index: 7, kind: output, shape index: {2}]
  %8 = xla_tuple %s5, %s6, %s7
  %s9 = sld [smem:[#allocation0]]
  $region73: #{unet_block_forward.2} parent=0
    _
  %s11 = ssub.s32 1, %s9
  %s12 = scalar_select 0, %s11, %s9
  loop: start=0, step=1, limit=6
  $region2: #{unet_block_forward.2} parent=0 // loop_pre_header
    _
  $region3: #{unet_block_forward.2} parent=0 // loop_header
    %s14 = sphi 0, %s18
    %p15 = scmp.ge.s32.totalorder %s14, 6
    %s24 = sphi 0, %s26
    %s27 = sphi 0, %s24
    %s28 = sphi 0, %s27
    %s44 = sphi 0, %s28
    %s50 = sphi 0, %s52
    %s53 = sphi 0, %s50
    %s54 = sphi 0, %s53
    %s70 = sphi 0, %s54
    %s74 = sphi 0, %s74
    %s76 = sphi 0, %s74
    %s77 = sphi 0, %s76
    %s91 = sphi 0, %s77
    %s95 = sphi 0, %s95
    %s97 = sphi 0, %s95
    %s98 = sphi 0, %s97
    %s112 = sphi 0, %s98
    %s116 = sphi 0, %s116
    %s118 = sphi 0, %s116
    %s119 = sphi 0, %s118
    %s133 = sphi 0, %s119
    %s139 = sphi 0, %s141
    %s142 = sphi 0, %s139
    %s143 = sphi 0, %s142
    %s159 = sphi 0, %s143
    %s163 = sphi 0, %s163
    %s165 = sphi 0, %s163
    %s166 = sphi 0, %s165
    %s180 = sphi 0, %s166
    %s184 = sphi 0, %s184
    %s186 = sphi 0, %s184
    %s187 = sphi 0, %s186
    %s201 = sphi 0, %s187
  $region4: #{unet_block_forward.2} parent=0 // loop_header_branch
    %17 = sbr.rel (%p15) target = $region8
  $region5: #{unet_block_forward.2} parent=0 // loop_body
    %s19 = ssub.s32 %s14, 1
    %s20 = ssub.s32 %s14, 2
    %s21 = sadd.s32 %s14, 1
    %s22 = ssub.s32 %s14, %s21
    %p23 = scmp.eq.s32.totalorder %s22, 0
    %s25 = sadd.s32 %s24, 1
    %s26 = scalar_select %p23, %s24, %s25
    %p29 = pneg %p23
    %p30 = scmp.eq.s32.totalorder %s14, 3
    %p31 = por %p29, %p30
    %p32 = scmp.ne.s32.totalorder %s24, %s27
    %p33 = scmp.eq.s32.totalorder %s14, 0
    %p34 = por %p32, %p33
    %p35 = scmp.ne.s32.totalorder %s24, %s27
    %p36 = scmp.eq.s32.totalorder %s19, 3
    %p37 = por %p35, %p36
    %p38 = scmp.ne.s32.totalorder %s27, %s28
    %p39 = scmp.eq.s32.totalorder %s19, 0
    %p40 = por %p38, %p39
    %p41 = scmp.ne.s32.totalorder %s27, %s28
    %p42 = scmp.eq.s32.totalorder %s20, 3
    %p43 = por %p41, %p42
    %p45 = scmp.ne.s32.totalorder %s28, %s44
    %p46 = scmp.eq.s32.totalorder %s20, 0
    %p47 = por %p45, %p46
    %s48 = ssub.s32 %s14, %s21
    %p49 = scmp.eq.s32.totalorder %s48, 0
    %s51 = sadd.s32 %s50, 1
    %s52 = scalar_select %p49, %s50, %s51
    %p55 = pneg %p49
    %p56 = scmp.eq.s32.totalorder %s14, 3
    %p57 = por %p55, %p56
    %p58 = scmp.ne.s32.totalorder %s50, %s53
    %p59 = scmp.eq.s32.totalorder %s14, 0
    %p60 = por %p58, %p59
    %p61 = scmp.ne.s32.totalorder %s50, %s53
    %p62 = scmp.eq.s32.totalorder %s19, 3
    %p63 = por %p61, %p62
    %p64 = scmp.ne.s32.totalorder %s53, %s54
    %p65 = scmp.eq.s32.totalorder %s19, 0
    %p66 = por %p64, %p65
    %p67 = scmp.ne.s32.totalorder %s53, %s54
    %p68 = scmp.eq.s32.totalorder %s20, 3
    %p69 = por %p67, %p68
    %p71 = scmp.ne.s32.totalorder %s54, %s70
    %p72 = scmp.eq.s32.totalorder %s20, 0
    %p73 = por %p71, %p72
    %s75 = sadd.s32 %s74, 1
    %p78 = scmp.eq.s32.totalorder %s14, 3
    %p79 = scmp.ne.s32.totalorder %s74, %s76
    %p80 = scmp.eq.s32.totalorder %s14, 0
    %p81 = por %p79, %p80
    %p82 = scmp.ne.s32.totalorder %s74, %s76
    %p83 = scmp.eq.s32.totalorder %s19, 3
    %p84 = por %p82, %p83
    %p85 = scmp.ne.s32.totalorder %s76, %s77
    %p86 = scmp.eq.s32.totalorder %s19, 0
    %p87 = por %p85, %p86
    %p88 = scmp.ne.s32.totalorder %s76, %s77
    %p89 = scmp.eq.s32.totalorder %s20, 3
    %p90 = por %p88, %p89
    %p92 = scmp.ne.s32.totalorder %s77, %s91
    %p93 = scmp.eq.s32.totalorder %s20, 0
    %p94 = por %p92, %p93
    %s96 = sadd.s32 %s95, 1
    %p99 = scmp.eq.s32.totalorder %s14, 3
    %p100 = scmp.ne.s32.totalorder %s95, %s97
    %p101 = scmp.eq.s32.totalorder %s14, 0
    %p102 = por %p100, %p101
    %p103 = scmp.ne.s32.totalorder %s95, %s97
    %p104 = scmp.eq.s32.totalorder %s19, 3
    %p105 = por %p103, %p104
    %p106 = scmp.ne.s32.totalorder %s97, %s98
    %p107 = scmp.eq.s32.totalorder %s19, 0
    %p108 = por %p106, %p107
    %p109 = scmp.ne.s32.totalorder %s97, %s98
    %p110 = scmp.eq.s32.totalorder %s20, 3
    %p111 = por %p109, %p110
    %p113 = scmp.ne.s32.totalorder %s98, %s112
    %p114 = scmp.eq.s32.totalorder %s20, 0
    %p115 = por %p113, %p114
    %s117 = sadd.s32 %s116, 1
    %p120 = scmp.eq.s32.totalorder %s14, 3
    %p121 = scmp.ne.s32.totalorder %s116, %s118
    %p122 = scmp.eq.s32.totalorder %s14, 0
    %p123 = por %p121, %p122
    %p124 = scmp.ne.s32.totalorder %s116, %s118
    %p125 = scmp.eq.s32.totalorder %s19, 3
    %p126 = por %p124, %p125
    %p127 = scmp.ne.s32.totalorder %s118, %s119
    %p128 = scmp.eq.s32.totalorder %s19, 0
    %p129 = por %p127, %p128
    %p130 = scmp.ne.s32.totalorder %s118, %s119
    %p131 = scmp.eq.s32.totalorder %s20, 3
    %p132 = por %p130, %p131
    %p134 = scmp.ne.s32.totalorder %s119, %s133
    %p135 = scmp.eq.s32.totalorder %s20, 0
    %p136 = por %p134, %p135
    %s137 = ssub.s32 %s14, %s21
    %p138 = scmp.eq.s32.totalorder %s137, 0
    %s140 = sadd.s32 %s139, 1
    %s141 = scalar_select %p138, %s139, %s140
    %p144 = pneg %p138
    %p145 = scmp.eq.s32.totalorder %s14, 3
    %p146 = por %p144, %p145
    %p147 = scmp.ne.s32.totalorder %s139, %s142
    %p148 = scmp.eq.s32.totalorder %s14, 0
    %p149 = por %p147, %p148
    %p150 = scmp.ne.s32.totalorder %s139, %s142
    %p151 = scmp.eq.s32.totalorder %s19, 3
    %p152 = por %p150, %p151
    %p153 = scmp.ne.s32.totalorder %s142, %s143
    %p154 = scmp.eq.s32.totalorder %s19, 0
    %p155 = por %p153, %p154
    %p156 = scmp.ne.s32.totalorder %s142, %s143
    %p157 = scmp.eq.s32.totalorder %s20, 3
    %p158 = por %p156, %p157
    %p160 = scmp.ne.s32.totalorder %s143, %s159
    %p161 = scmp.eq.s32.totalorder %s20, 0
    %p162 = por %p160, %p161
    %s164 = sadd.s32 %s163, 1
    %p167 = scmp.eq.s32.totalorder %s14, 3
    %p168 = scmp.ne.s32.totalorder %s163, %s165
    %p169 = scmp.eq.s32.totalorder %s14, 0
    %p170 = por %p168, %p169
    %p171 = scmp.ne.s32.totalorder %s163, %s165
    %p172 = scmp.eq.s32.totalorder %s19, 3
    %p173 = por %p171, %p172
    %p174 = scmp.ne.s32.totalorder %s165, %s166
    %p175 = scmp.eq.s32.totalorder %s19, 0
    %p176 = por %p174, %p175
    %p177 = scmp.ne.s32.totalorder %s165, %s166
    %p178 = scmp.eq.s32.totalorder %s20, 3
    %p179 = por %p177, %p178
    %p181 = scmp.ne.s32.totalorder %s166, %s180
    %p182 = scmp.eq.s32.totalorder %s20, 0
    %p183 = por %p181, %p182
    %s185 = sadd.s32 %s184, 1
    %p188 = scmp.eq.s32.totalorder %s14, 3
    %p189 = scmp.ne.s32.totalorder %s184, %s186
    %p190 = scmp.eq.s32.totalorder %s14, 0
    %p191 = por %p189, %p190
    %p192 = scmp.ne.s32.totalorder %s184, %s186
    %p193 = scmp.eq.s32.totalorder %s19, 3
    %p194 = por %p192, %p193
    %p195 = scmp.ne.s32.totalorder %s186, %s187
    %p196 = scmp.eq.s32.totalorder %s19, 0
    %p197 = por %p195, %p196
    %p198 = scmp.ne.s32.totalorder %s186, %s187
    %p199 = scmp.eq.s32.totalorder %s20, 3
    %p200 = por %p198, %p199
    %p202 = scmp.ne.s32.totalorder %s187, %s201
    %p203 = scmp.eq.s32.totalorder %s20, 0
    %p204 = por %p202, %p203
    %p205 = scmp.le.s32.totalorder 1, %s14
    %p206 = scmp.lt.s32.totalorder %s14, 5
    %p207 = pnand %p205, %p206
    %p208 = pneg %p207
    // Predicated region
    $region9: #{unet_block_forward.2} parent=5 // pred_check
      _
    $region10: #{unet_block_forward.2} parent=5 // pred_check_branch
      %210 = sbr.rel (%p207) target = $region12
    $region11: #{unet_block_forward.2} parent=5 // pred_region
      %s211 = ssub.s32 %s14, 1
      // Predicated region
      $region13: #{unet_block_forward.2} parent=11 // pred_check
        %p212 = pneg %p87
      $region14: #{unet_block_forward.2} parent=11 // pred_check_branch
        %214 = sbr.rel (%p212) target = $region16
      $region15: #{unet_block_forward.2} parent=11 // pred_region
        _
      $region16: #{unet_block_forward.2} parent=11 // pred_fallthru
        _
      // Predicated region
      $region17: #{unet_block_forward.2} parent=11 // pred_check
        %p215 = pneg %p108
      $region18: #{unet_block_forward.2} parent=11 // pred_check_branch
        %217 = sbr.rel (%p215) target = $region20
      $region19: #{unet_block_forward.2} parent=11 // pred_region
        _
      $region20: #{unet_block_forward.2} parent=11 // pred_fallthru
        _
      // Predicated region
      $region21: #{unet_block_forward.2} parent=11 // pred_check
        %p218 = pneg %p129
      $region22: #{unet_block_forward.2} parent=11 // pred_check_branch
        %220 = sbr.rel (%p218) target = $region24
      $region23: #{unet_block_forward.2} parent=11 // pred_region
        _
      $region24: #{unet_block_forward.2} parent=11 // pred_fallthru
        _
    $region12: #{unet_block_forward.2} parent=5 // pred_fallthru
      _
    %p221 = scmp.lt.s32.totalorder %s14, 4
    // Predicated region
    $region25: #{unet_block_forward.2} parent=5 // pred_check
      %p222 = pneg %p221
    $region26: #{unet_block_forward.2} parent=5 // pred_check_branch
      %224 = sbr.rel (%p222) target = $region28
    $region27: #{unet_block_forward.2} parent=5 // pred_region
      // Predicated region
      $region29: #{unet_block_forward.2} parent=27 // pred_check
        %p225 = pneg %p34
      $region30: #{unet_block_forward.2} parent=27 // pred_check_branch
        %227 = sbr.rel (%p225) target = $region32
      $region31: #{unet_block_forward.2} parent=27 // pred_region
        %s228 = smul.u32 8, %s14
        %p229 = scmp.lt.s32.totalorder %s228, 31
        %s230 = scalar_select %p229, %s228, 31
        %s231 = smul.addr %s230, 8
        %s232 = scalar_lea.vmem %s0, %s231
        %s233 = smul.u32 8, %s14
      $region32: #{unet_block_forward.2} parent=27 // pred_fallthru
        _
      // Predicated region
      $region33: #{unet_block_forward.2} parent=27 // pred_check
        %p234 = pneg %p60
      $region34: #{unet_block_forward.2} parent=27 // pred_check_branch
        %236 = sbr.rel (%p234) target = $region36
      $region35: #{unet_block_forward.2} parent=27 // pred_region
        %s237 = smul.u32 8, %s14
        %p238 = scmp.lt.s32.totalorder %s237, 31
        %s239 = scalar_select %p238, %s237, 31
        %s240 = smul.addr %s239, 8
        %s241 = scalar_lea.vmem %s1, %s240
        %s242 = smul.u32 8, %s14
      $region36: #{unet_block_forward.2} parent=27 // pred_fallthru
        _
    $region28: #{unet_block_forward.2} parent=5 // pred_fallthru
      _
    %p243 = scmp.le.s32.totalorder 1, %s14
    %p244 = scmp.lt.s32.totalorder %s14, 5
    %p245 = pnand %p243, %p244
    %p246 = pneg %p245
    // Predicated region
    $region37: #{unet_block_forward.2} parent=5 // pred_check
      _
    $region38: #{unet_block_forward.2} parent=5 // pred_check_branch
      %248 = sbr.rel (%p245) target = $region40
    $region39: #{unet_block_forward.2} parent=5 // pred_region
      %s249 = ssub.s32 %s14, 1
      %s250 = smul.u32 8, %s19
      %p251 = scmp.lt.s32.totalorder %s250, 31
      %s252 = scalar_select %p251, %s250, 31
      %s253 = smul.addr %s252, 8
      %s254 = scalar_lea.vmem %s0, %s253
      %p255 = pneg %p40
      %p256 = pneg %p37
      %s257 = smul.u32 8, %s19
      %p258 = scmp.lt.s32.totalorder %s257, 31
      %s259 = scalar_select %p258, %s257, 31
      %s260 = smul.addr %s259, 8
      %s261 = scalar_lea.vmem %s1, %s260
      %p262 = pneg %p66
      %p263 = pneg %p63
      %p264 = pneg %p87
      %p265 = pneg %p84
      %p266 = pneg %p108
      %p267 = pneg %p105
      %p268 = pneg %p129
      %p269 = pneg %p126
      %p270 = pneg %p155
      %p271 = pneg %p152
      %s272 = smul.u32 8, %s19
      %p273 = scmp.lt.s32.totalorder %s272, 31
      %s274 = scalar_select %p273, %s272, 31
      %s275 = smul.addr %s274, 8
      %s276 = scalar_lea.vmem %s5, %s275
      %p277 = pneg %p176
      %p278 = pneg %p173
      %p279 = pneg %p197
      %p280 = pneg %p194
      %s281 = smul.u32 8, %s19
      %p282 = scmp.lt.s32.totalorder %s281, 31
      %s283 = scalar_select %p282, %s281, 31
      %s284 = smul.addr %s283, 8
      %s285 = scalar_lea.vmem %s0, %s284
      %s286 = smul.u32 8, %s19
      %s287 = smul.u32 8, %s19
      %p288 = scmp.lt.s32.totalorder %s287, 31
      %s289 = scalar_select %p288, %s287, 31
      %s290 = smul.addr %s289, 8
      %s291 = scalar_lea.vmem %s1, %s290
      %s292 = smul.u32 8, %s19
      %s293 = smul.u32 8, %s19
      %p294 = scmp.lt.s32.totalorder %s293, 31
      %s295 = scalar_select %p294, %s293, 31
      %s296 = smul.addr %s295, 8
      %s297 = scalar_lea.vmem %s5, %s296
      %s298 = smul.u32 8, %s19
      %v299 = vld [vmem:[%s285] sm:$0xff]
      %v300 = vld [vmem:[%s285 + $0x8] sm:$0xff]
      %v301 = vld [vmem:[%s285 + $0x10] sm:$0xff]
      %v302 = vld [vmem:[%s285 + $0x18] sm:$0xff]
      %v303 = vld [vmem:[%s285 + $0x20] sm:$0xff]
      %v304 = vld [vmem:[%s285 + $0x28] sm:$0xff]
      %v305 = vld [vmem:[%s285 + $0x30] sm:$0xff]
      %v306 = vld [vmem:[%s285 + $0x38] sm:$0xff]
      %v307 = vld [vmem:[%s2] sm:$0xff]
      %v308 = vld [vmem:[%s291] sm:$0xff]
      %v309 = vld [vmem:[%s291 + $0x8] sm:$0xff]
      %v310 = vld [vmem:[%s291 + $0x10] sm:$0xff]
      %v311 = vld [vmem:[%s291 + $0x18] sm:$0xff]
      %v312 = vld [vmem:[%s291 + $0x20] sm:$0xff]
      %v313 = vld [vmem:[%s291 + $0x28] sm:$0xff]
      %v314 = vld [vmem:[%s291 + $0x30] sm:$0xff]
      %v315 = vld [vmem:[%s291 + $0x38] sm:$0xff]
      %v316 = vld [vmem:[%s3] sm:$0xff]
      %v317 = vld [vmem:[%s3 + $0x8] sm:$0xff]
      %v318 = vld [vmem:[%s3 + $0x10] sm:$0xff]
      %v319 = vld [vmem:[%s3 + $0x18] sm:$0xff]
      %vm320 = vcmask 261120
      %v322 = vsel %vm320, %v308, 0
      %v325 = vsel %vm320, %v309, 0
      %v328 = vsel %vm320, %v310, 0
      %v331 = vsel %vm320, %v311, 0
      %v334 = vsel %vm320, %v312, 0
      %v337 = vsel %vm320, %v313, 0
      %v340 = vsel %vm320, %v314, 0
      %v343 = vsel %vm320, %v315, 0
      %345 = vmatprep.subr.mxu0 0.0
      %346 = vmatpush1.msra.mxu0 0.0
      %347 = vmatprep.subr.mxu0 0.0
      %348 = vmatpush1.msra.mxu0 0.0
      %349 = vmatprep.subr.mxu0 0.0
      %350 = vmatpush1.msra.mxu0 0.0
      %351 = vmatprep.subr.mxu0 0.0
      %352 = vmatpush1.msra.mxu0 0.0
      %353 = vmatprep.subr.mxu0 0.0
      %354 = vmatpush1.msra.mxu0 0.0
      %355 = vmatprep.subr.mxu0 0.0
      %356 = vmatpush1.msra.mxu0 0.0
      %357 = vmatprep.subr.mxu0 0.0
      %358 = vmatpush1.msra.mxu0 0.0
      %359 = vmatprep.subr.mxu0 0.0
      %360 = vmatpush1.msra.mxu0 0.0
      %361 = vmatprep.subr.mxu0 0.0
      %362 = vmatpush1.msra.mxu0 0.0
      %363 = vmatprep.subr.mxu0 0.0
      %364 = vmatpush1.msra.mxu0 0.0
      %365 = vmatprep.subr.mxu0 0.0
      %366 = vmatpush1.msra.mxu0 0.0
      %367 = vmatprep.subr.mxu0 0.0
      %368 = vmatpush1.msra.mxu0 0.0
      %369 = vmatprep.subr.mxu0 0.0
      %370 = vmatpush1.msra.mxu0 %v319
      %371 = vmatprep.subr.mxu0 0.0
      %372 = vmatpush1.msra.mxu0 %v318
      %373 = vmatprep.subr.mxu0 0.0
      %374 = vmatpush1.msra.mxu0 %v317
      %375 = vmatprep.subr.mxu0 0.0
      %376 = vmatpush1.msra.mxu0 %v316
      %377 = vmatprep.subr.mxu0 0.0
      %378 = vmatpush2.msra.mxu0 0.0
      %379 = vmatprep.subr.mxu0 0.0
      %380 = vmatpush2.msra.mxu0 0.0
      %381 = vmatprep.subr.mxu0 0.0
      %382 = vmatpush2.msra.mxu0 0.0
      %383 = vmatprep.subr.mxu0 0.0
      %384 = vmatpush2.msra.mxu0 0.0
      %385 = vmatprep.subr.mxu0 0.0
      %386 = vmatpush2.msra.mxu0 0.0
      %387 = vmatprep.subr.mxu0 0.0
      %388 = vmatpush2.msra.mxu0 0.0
      %389 = vmatprep.subr.mxu0 0.0
      %390 = vmatpush2.msra.mxu0 0.0
      %391 = vmatprep.subr.mxu0 0.0
      %392 = vmatpush2.msra.mxu0 0.0
      %393 = vmatprep.subr.mxu0 0.0
      %394 = vmatpush2.msra.mxu0 0.0
      %395 = vmatprep.subr.mxu0 0.0
      %396 = vmatpush2.msra.mxu0 0.0
      %397 = vmatprep.subr.mxu0 0.0
      %398 = vmatpush2.msra.mxu0 0.0
      %399 = vmatprep.subr.mxu0 0.0
      %400 = vmatpush2.msra.mxu0 0.0
      %401 = vmatprep.subr.mxu0 0.0
      %402 = vmatpush2.msra.mxu0 0.0
      %403 = vmatprep.subr.mxu0 0.0
      %404 = vmatpush2.msra.mxu0 0.0
      %405 = vmatprep.subr.mxu0 0.0
      %406 = vmatpush2.msra.mxu0 0.0
      %407 = vmatprep.subr.mxu0 0.0
      %408 = vmatpush2.msra.mxu0 0.0
      %409 = vmatprep.mubr.f32.mxu0 0.0
      %410 = vmatmul.mubr.f32.gmra.mxu0 %v322
      %v411 = vpop.f32.mrf.mxu0
      %v412 = vadd.f32 0.0, %v411
      %v413 = vpop.f32.mrf.mxu0
      %414 = vmatprep.mubr.f32.mxu0 0.0
      %415 = vmatmul.mubr.f32.gmra.mxu0 %v325
      %v416 = vpop.f32.mrf.mxu0
      %v417 = vadd.f32 0.0, %v416
      %v418 = vpop.f32.mrf.mxu0
      %419 = vmatprep.mubr.f32.mxu0 0.0
      %420 = vmatmul.mubr.f32.gmra.mxu0 %v328
      %v421 = vpop.f32.mrf.mxu0
      %v422 = vadd.f32 0.0, %v421
      %v423 = vpop.f32.mrf.mxu0
      %424 = vmatprep.mubr.f32.mxu0 0.0
      %425 = vmatmul.mubr.f32.gmra.mxu0 %v331
      %v426 = vpop.f32.mrf.mxu0
      %v427 = vadd.f32 0.0, %v426
      %v428 = vpop.f32.mrf.mxu0
      %429 = vmatprep.mubr.f32.mxu0 0.0
      %430 = vmatmul.mubr.f32.gmra.mxu0 %v334
      %v431 = vpop.f32.mrf.mxu0
      %v432 = vadd.f32 0.0, %v431
      %v433 = vpop.f32.mrf.mxu0
      %434 = vmatprep.mubr.f32.mxu0 0.0
      %435 = vmatmul.mubr.f32.gmra.mxu0 %v337
      %v436 = vpop.f32.mrf.mxu0
      %v437 = vadd.f32 0.0, %v436
      %v438 = vpop.f32.mrf.mxu0
      %439 = vmatprep.mubr.f32.mxu0 0.0
      %440 = vmatmul.mubr.f32.gmra.mxu0 %v340
      %v441 = vpop.f32.mrf.mxu0
      %v442 = vadd.f32 0.0, %v441
      %v443 = vpop.f32.mrf.mxu0
      %444 = vmatprep.mubr.f32.mxu0 0.0
      %445 = vmatmul.mubr.f32.gmra.mxu0 %v343
      %v446 = vpop.f32.mrf.mxu0
      %v447 = vadd.f32 0.0, %v446
      %v448 = vpop.f32.mrf.mxu0
      %449 = vdwg.mxu0
      %vm450 = vcmask 64512
      %v452 = vsel %vm450, %v299, 0
      %v455 = vsel %vm450, %v300, 0
      %v458 = vsel %vm450, %v301, 0
      %v461 = vsel %vm450, %v302, 0
      %v464 = vsel %vm450, %v303, 0
      %v467 = vsel %vm450, %v304, 0
      %v470 = vsel %vm450, %v305, 0
      %v473 = vsel %vm450, %v306, 0
      %475 = vmatprep.subr.mxu0 0.0
      %476 = vmatpush1.msra.mxu0 0.0
      %477 = vmatprep.subr.mxu0 0.0
      %478 = vmatpush1.msra.mxu0 0.0
      %479 = vmatprep.subr.mxu0 0.0
      %480 = vmatpush1.msra.mxu0 0.0
      %481 = vmatprep.subr.mxu0 0.0
      %482 = vmatpush1.msra.mxu0 0.0
      %483 = vmatprep.subr.mxu0 0.0
      %484 = vmatpush1.msra.mxu0 0.0
      %485 = vmatprep.subr.mxu0 0.0
      %486 = vmatpush1.msra.mxu0 0.0
      %487 = vmatprep.subr.mxu0 0.0
      %488 = vmatpush1.msra.mxu0 0.0
      %489 = vmatprep.subr.mxu0 0.0
      %490 = vmatpush1.msra.mxu0 0.0
      %491 = vmatprep.subr.mxu0 0.0
      %492 = vmatpush1.msra.mxu0 0.0
      %493 = vmatprep.subr.mxu0 0.0
      %494 = vmatpush1.msra.mxu0 0.0
      %495 = vmatprep.subr.mxu0 0.0
      %496 = vmatpush1.msra.mxu0 0.0
      %497 = vmatprep.subr.mxu0 0.0
      %498 = vmatpush1.msra.mxu0 0.0
      %499 = vmatprep.subr.mxu0 0.0
      %500 = vmatpush1.msra.mxu0 0.0
      %501 = vmatprep.subr.mxu0 0.0
      %502 = vmatpush1.msra.mxu0 0.0
      %503 = vmatprep.subr.mxu0 0.0
      %504 = vmatpush1.msra.mxu0 0.0
      %505 = vmatprep.subr.mxu0 0.0
      %506 = vmatpush1.msra.mxu0 %v307
      %507 = vmatprep.subr.mxu0 0.0
      %508 = vmatpush2.msra.mxu0 0.0
      %509 = vmatprep.subr.mxu0 0.0
      %510 = vmatpush2.msra.mxu0 0.0
      %511 = vmatprep.subr.mxu0 0.0
      %512 = vmatpush2.msra.mxu0 0.0
      %513 = vmatprep.subr.mxu0 0.0
      %514 = vmatpush2.msra.mxu0 0.0
      %515 = vmatprep.subr.mxu0 0.0
      %516 = vmatpush2.msra.mxu0 0.0
      %517 = vmatprep.subr.mxu0 0.0
      %518 = vmatpush2.msra.mxu0 0.0
      %519 = vmatprep.subr.mxu0 0.0
      %520 = vmatpush2.msra.mxu0 0.0
      %521 = vmatprep.subr.mxu0 0.0
      %522 = vmatpush2.msra.mxu0 0.0
      %523 = vmatprep.subr.mxu0 0.0
      %524 = vmatpush2.msra.mxu0 0.0
      %525 = vmatprep.subr.mxu0 0.0
      %526 = vmatpush2.msra.mxu0 0.0
      %527 = vmatprep.subr.mxu0 0.0
      %528 = vmatpush2.msra.mxu0 0.0
      %529 = vmatprep.subr.mxu0 0.0
      %530 = vmatpush2.msra.mxu0 0.0
      %531 = vmatprep.subr.mxu0 0.0
      %532 = vmatpush2.msra.mxu0 0.0
      %533 = vmatprep.subr.mxu0 0.0
      %534 = vmatpush2.msra.mxu0 0.0
      %535 = vmatprep.subr.mxu0 0.0
      %536 = vmatpush2.msra.mxu0 0.0
      %537 = vmatprep.subr.mxu0 0.0
      %538 = vmatpush2.msra.mxu0 0.0
      %539 = vmatprep.mubr.f32.mxu0 0.0
      %540 = vmatmul.mubr.f32.gmra.mxu0 %v452
      %v541 = vpop.f32.mrf.mxu0
      %v542 = vadd.f32 %v412, %v541
      %v543 = vpop.f32.mrf.mxu0
      %544 = vmatprep.mubr.f32.mxu0 0.0
      %545 = vmatmul.mubr.f32.gmra.mxu0 %v455
      %v546 = vpop.f32.mrf.mxu0
      %v547 = vadd.f32 %v417, %v546
      %v548 = vpop.f32.mrf.mxu0
      %549 = vmatprep.mubr.f32.mxu0 0.0
      %550 = vmatmul.mubr.f32.gmra.mxu0 %v458
      %v551 = vpop.f32.mrf.mxu0
      %v552 = vadd.f32 %v422, %v551
      %v553 = vpop.f32.mrf.mxu0
      %554 = vmatprep.mubr.f32.mxu0 0.0
      %555 = vmatmul.mubr.f32.gmra.mxu0 %v461
      %v556 = vpop.f32.mrf.mxu0
      %v557 = vadd.f32 %v427, %v556
      %v558 = vpop.f32.mrf.mxu0
      %559 = vmatprep.mubr.f32.mxu0 0.0
      %560 = vmatmul.mubr.f32.gmra.mxu0 %v464
      %v561 = vpop.f32.mrf.mxu0
      %v562 = vadd.f32 %v432, %v561
      %v563 = vpop.f32.mrf.mxu0
      %564 = vmatprep.mubr.f32.mxu0 0.0
      %565 = vmatmul.mubr.f32.gmra.mxu0 %v467
      %v566 = vpop.f32.mrf.mxu0
      %v567 = vadd.f32 %v437, %v566
      %v568 = vpop.f32.mrf.mxu0
      %569 = vmatprep.mubr.f32.mxu0 0.0
      %570 = vmatmul.mubr.f32.gmra.mxu0 %v470
      %v571 = vpop.f32.mrf.mxu0
      %v572 = vadd.f32 %v442, %v571
      %v573 = vpop.f32.mrf.mxu0
      %574 = vmatprep.mubr.f32.mxu0 0.0
      %575 = vmatmul.mubr.f32.gmra.mxu0 %v473
      %v576 = vpop.f32.mrf.mxu0
      %v577 = vadd.f32 %v447, %v576
      %v578 = vpop.f32.mrf.mxu0
      %579 = vdwg.mxu0
      %v580 = vld [vmem:[%s4] sm:$0x1]
      %v582 = vlaneseq
      %v583 = vshrl.u32 %v582, 7
      %v584 = vsub.s32 0, %v583
      %v585 = vrot.slane %v580, %v584
      %v587 = vadd.f32 %v542, %v585
      %v588 = vadd.f32 %v547, %v585
      %v589 = vadd.f32 %v552, %v585
      %v590 = vadd.f32 %v557, %v585
      %v591 = vadd.f32 %v562, %v585
      %v592 = vadd.f32 %v567, %v585
      %v593 = vadd.f32 %v572, %v585
      %v594 = vadd.f32 %v577, %v585
      %v595 = vmax.f32 %v587, 0.0
      %v596 = vmax.f32 %v588, 0.0
      %v597 = vmax.f32 %v589, 0.0
      %v598 = vmax.f32 %v590, 0.0
      %v599 = vmax.f32 %v591, 0.0
      %v600 = vmax.f32 %v592, 0.0
      %v601 = vmax.f32 %v593, 0.0
      %v602 = vmax.f32 %v594, 0.0
      %603 = vst.msk [vmem:[%s297] sm:$0xff] %vm320, %v595
      %604 = vst.msk [vmem:[%s297 + $0x8] sm:$0xff] %vm320, %v596
      %605 = vst.msk [vmem:[%s297 + $0x10] sm:$0xff] %vm320, %v597
      %606 = vst.msk [vmem:[%s297 + $0x18] sm:$0xff] %vm320, %v598
      %607 = vst.msk [vmem:[%s297 + $0x20] sm:$0xff] %vm320, %v599
      %608 = vst.msk [vmem:[%s297 + $0x28] sm:$0xff] %vm320, %v600
      %609 = vst.msk [vmem:[%s297 + $0x30] sm:$0xff] %vm320, %v601
      %610 = vst.msk [vmem:[%s297 + $0x38] sm:$0xff] %vm320, %v602
      %p611 = scmp.eq.s32.totalorder %s19, 0
      // Predicated region
      $region41: #{unet_block_forward.2} parent=39 // pred_check
        %p612 = pneg %p611
      $region42: #{unet_block_forward.2} parent=39 // pred_check_branch
        %614 = sbr.rel (%p612) target = $region44
      $region43: #{unet_block_forward.2} parent=39 // pred_region
        %vm615 = vcmask 253952
        %616 = vst.msk [vmem:[%s6] sm:$0x1] %vm615, 0.0
        %617 = vst.msk [vmem:[%s7] sm:$0x1] %vm615, 0.0
      $region44: #{unet_block_forward.2} parent=39 // pred_fallthru
        _
      %v618 = vld [vmem:[%s6] sm:$0x1]
      %v619 = vsel %vm320, %v595, 0.0
      %v620 = vsel %vm320, %v596, 0.0
      %v621 = vadd.f32 %v619, %v620
      %v622 = vsel %vm320, %v597, 0.0
      %v623 = vadd.f32 %v621, %v622
      %v624 = vsel %vm320, %v598, 0.0
      %v625 = vadd.f32 %v623, %v624
      %v626 = vsel %vm320, %v599, 0.0
      %v627 = vadd.f32 %v625, %v626
      %v628 = vsel %vm320, %v600, 0.0
      %v629 = vadd.f32 %v627, %v628
      %v630 = vsel %vm320, %v601, 0.0
      %v631 = vadd.f32 %v629, %v630
      %v632 = vsel %vm320, %v602, 0.0
      %v633 = vadd.f32 %v631, %v632
      %v634 = vrot.slane %v633, 4
      %v635 = vadd.f32 %v633, %v634
      %v636 = vrot.slane %v635, 2
      %v637 = vadd.f32 %v635, %v636
      %v638 = vrot.slane %v637, 1
      %v639 = vadd.f32 %v637, %v638
      %v640 = vadd.f32 %v618, %v639
      %vm641 = vcmask 253952
      %642 = vst.msk [vmem:[%s6] sm:$0x1] %vm641, %v640
      %v643 = vld [vmem:[%s7] sm:$0x1]
      %v644 = vmul.f32 %v595, %v595
      %v645 = vmul.f32 %v596, %v596
      %v646 = vmul.f32 %v597, %v597
      %v647 = vmul.f32 %v598, %v598
      %v648 = vmul.f32 %v599, %v599
      %v649 = vmul.f32 %v600, %v600
      %v650 = vmul.f32 %v601, %v601
      %v651 = vmul.f32 %v602, %v602
      %v652 = vsel %vm320, %v644, 0.0
      %v653 = vsel %vm320, %v645, 0.0
      %v654 = vadd.f32 %v652, %v653
      %v655 = vsel %vm320, %v646, 0.0
      %v656 = vadd.f32 %v654, %v655
      %v657 = vsel %vm320, %v647, 0.0
      %v658 = vadd.f32 %v656, %v657
      %v659 = vsel %vm320, %v648, 0.0
      %v660 = vadd.f32 %v658, %v659
      %v661 = vsel %vm320, %v649, 0.0
      %v662 = vadd.f32 %v660, %v661
      %v663 = vsel %vm320, %v650, 0.0
      %v664 = vadd.f32 %v662, %v663
      %v665 = vsel %vm320, %v651, 0.0
      %v666 = vadd.f32 %v664, %v665
      %v667 = vrot.slane %v666, 4
      %v668 = vadd.f32 %v666, %v667
      %v669 = vrot.slane %v668, 2
      %v670 = vadd.f32 %v668, %v669
      %v671 = vrot.slane %v670, 1
      %v672 = vadd.f32 %v670, %v671
      %v673 = vadd.f32 %v643, %v672
      %674 = vst.msk [vmem:[%s7] sm:$0x1] %vm641, %v673
      %s675 = smul.u32 8, %s19
      %p676 = scmp.lt.s32.totalorder %s675, 31
      %s677 = scalar_select %p676, %s675, 31
      %s678 = smul.addr %s677, 8
      %s679 = scalar_lea.vmem %s5, %s678
      // Predicated region
      $region45: #{unet_block_forward.2} parent=39 // pred_check
        %p680 = pneg %p152
      $region46: #{unet_block_forward.2} parent=39 // pred_check_branch
        %682 = sbr.rel (%p680) target = $region48
      $region47: #{unet_block_forward.2} parent=39 // pred_region
        %s683 = smul.u32 8, %s19
      $region48: #{unet_block_forward.2} parent=39 // pred_fallthru
        _
      // Predicated region
      $region49: #{unet_block_forward.2} parent=39 // pred_check
        %p684 = pneg %p173
      $region50: #{unet_block_forward.2} parent=39 // pred_check_branch
        %686 = sbr.rel (%p684) target = $region52
      $region51: #{unet_block_forward.2} parent=39 // pred_region
        _
      $region52: #{unet_block_forward.2} parent=39 // pred_fallthru
        _
      // Predicated region
      $region53: #{unet_block_forward.2} parent=39 // pred_check
        %p687 = pneg %p194
      $region54: #{unet_block_forward.2} parent=39 // pred_check_branch
        %689 = sbr.rel (%p687) target = $region56
      $region55: #{unet_block_forward.2} parent=39 // pred_region
        _
      $region56: #{unet_block_forward.2} parent=39 // pred_fallthru
        _
      // Predicated region
      $region57: #{unet_block_forward.2} parent=39 // pred_check
        %p690 = pneg %p173
      $region58: #{unet_block_forward.2} parent=39 // pred_check_branch
        %692 = sbr.rel (%p690) target = $region60
      $region59: #{unet_block_forward.2} parent=39 // pred_region
        _
      $region60: #{unet_block_forward.2} parent=39 // pred_fallthru
        _
      // Predicated region
      $region61: #{unet_block_forward.2} parent=39 // pred_check
        %p693 = pneg %p194
      $region62: #{unet_block_forward.2} parent=39 // pred_check_branch
        %695 = sbr.rel (%p693) target = $region64
      $region63: #{unet_block_forward.2} parent=39 // pred_region
        _
      $region64: #{unet_block_forward.2} parent=39 // pred_fallthru
        _
    $region40: #{unet_block_forward.2} parent=5 // pred_fallthru
      _
    %p696 = scmp.le.s32.totalorder 2, %s14
    // Predicated region
    $region65: #{unet_block_forward.2} parent=5 // pred_check
      %p697 = pneg %p696
    $region66: #{unet_block_forward.2} parent=5 // pred_check_branch
      %699 = sbr.rel (%p697) target = $region68
    $region67: #{unet_block_forward.2} parent=5 // pred_region
      %s700 = ssub.s32 %s14, 2
      // Predicated region
      $region69: #{unet_block_forward.2} parent=67 // pred_check
        %p701 = pneg %p158
      $region70: #{unet_block_forward.2} parent=67 // pred_check_branch
        %703 = sbr.rel (%p701) target = $region72
      $region71: #{unet_block_forward.2} parent=67 // pred_region
        %s704 = smul.u32 8, %s20
        %p705 = scmp.lt.s32.totalorder %s704, 31
        %s706 = scalar_select %p705, %s704, 31
        %s707 = smul.addr %s706, 8
        %s708 = scalar_lea.vmem %s5, %s707
      $region72: #{unet_block_forward.2} parent=67 // pred_fallthru
        _
    $region68: #{unet_block_forward.2} parent=5 // pred_fallthru
      _
  $region6: #{unet_block_forward.2} parent=0 // loop_footer
    %s18 = sadd.s32 1, %s14
  $region7: #{unet_block_forward.2} parent=0 // loop_footer_branch
    %13 = sbr.rel target = $region3
  $region8: #{unet_block_forward.2} parent=0 // loop_exit
    _

</llo_original>
